<compile_context>
chip_gen: v6e
topology: v6e:2x2x1
jax: 0.10.0
libtpu: 0.0.40
codegen_flags: <defaults>
</compile_context>

<pallas_src>
import functools

import jax
import jax.numpy as jnp
from jax import lax
from jax.experimental import pallas as pl
from jax.experimental.pallas import tpu as pltpu


# ----------------------------------------------------------------------------
# Kernel
# ----------------------------------------------------------------------------
def mlp_kernel(x_ref, g_ref, beta_ref, w1_ref, b1_ref, w2_ref, b2_ref,
               o_ref, xn_ref, acc_ref):
    k = pl.program_id(1)

    # --- First H-slab for this token tile: LayerNorm (single-pass stats) and
    #     accumulator init.  eps = 1e-5 (PyTorch default), statistics in f32.
    @pl.when(k == 0)
    def _():
        x = x_ref[...].astype(jnp.float32)                      # (tm, D)
        mean = jnp.mean(x, axis=-1, keepdims=True)
        m2 = jnp.mean(x * x, axis=-1, keepdims=True)
        var = jnp.maximum(m2 - mean * mean, 0.0)                # one-pass variance
        xn = (x - mean) * lax.rsqrt(var + 1e-5)
        xn = xn * g_ref[...] + beta_ref[...]
        xn_ref[...] = xn.astype(jnp.bfloat16)                   # 1st matmul operand
        acc_ref[...] = jnp.zeros_like(acc_ref)

    # --- Linear(D -> tH slab): bf16 into the MXU, f32 accumulation; bias; GELU.
    h = jnp.dot(xn_ref[...], w1_ref[...], preferred_element_type=jnp.float32)
    # Dropout (eval): identity.  GELU tanh approximation -> EUP slot.
    h = jax.nn.gelu(h + b1_ref[...], approximate=True)

    # --- Linear(tH slab -> D), accumulated into the f32 scratch.
    acc_ref[...] += jnp.dot(h.astype(jnp.bfloat16), w2_ref[...],
                            preferred_element_type=jnp.float32)

    # --- Last H-slab: add output bias and write the tile (Dropout: identity).
    @pl.when(k == pl.num_programs(1) - 1)
    def _():
        o_ref[...] = (acc_ref[...] + b2_ref[...]).astype(o_ref.dtype)


# ----------------------------------------------------------------------------
# Tiling / VMEM policy helpers
# ----------------------------------------------------------------------------
def _round_up(n, m):
    return ((n + m - 1) // m) * m


def _tpu_vmem_capacity():
    """Per-core VMEM capacity in bytes (conservative fallback if unavailable)."""
    try:
        return int(pltpu.get_tpu_info().vmem_capacity_bytes)
    except Exception:
        return 64 * 1024 * 1024  # v7x per-TensorCore size; safe lower bound


def _choose_th(D, H, vmem_cap):
    """Full weight residency when bf16 weights fit ~1/3 of VMEM; otherwise tile
    H with the largest 128-multiple divisor of H whose slabs fit the budget."""
    budget = vmem_cap // 3
    if 2 * D * H * 2 <= budget or H % 128 != 0:
        return H
    for cand in range(H - 128, 127, -128):
        if H % cand == 0 and 2 * (2 * D * cand * 2) <= budget:
            return cand
    return 128


def _vmem_limit_bytes(tm, D, H, th, n_k, in_bytes, out_bytes, vmem_cap):
    """Footprint-derived VMEM limit with >=12 MiB headroom below physical."""
    w_nbuf = 1 if n_k == 1 else 2
    act = 2 * tm * D * (in_bytes + out_bytes)          # double-buffered x / out tiles
    wslabs = 2 * D * th * 2 * w_nbuf                   # bf16 W1 + W2 slabs
    vecs = (2 * D + H + D) * 4 * 2                     # gamma/beta/b1/b2 (f32)
    scratch = tm * D * (2 + 4)                         # xn bf16 + acc f32 scratch
    interm = 2 * tm * th * 4                           # live f32 h slab (+ slack)
    est = act + wslabs + vecs + scratch + interm
    headroom = 12 * 1024 * 1024
    limit = min(max(int(1.5 * est), 32 * 1024 * 1024), vmem_cap - headroom)
    return int(max(limit, int(1.2 * est)))             # never cap below usage


_HAS_BUFFERED = hasattr(pl, "Buffered")


def _spec(shape, index_map, *, single_buffer):
    # Constant-index blocks never change -> single-buffer them to reclaim VMEM.
    # Capability-gated (no broad try/except around the whole pallas_call).
    if single_buffer and _HAS_BUFFERED:
        return pl.BlockSpec(shape, index_map, pipeline_mode=pl.Buffered(1))
    return pl.BlockSpec(shape, index_map)


# ----------------------------------------------------------------------------
# Forward
# ----------------------------------------------------------------------------
def prepare_params(gamma, beta, w1, b1, w2, b2):
    """Call ONCE at init.  Weights stored bf16, vectors f32 2-D, so the
    per-step forward pays no casting/reshaping HBM traffic.
    Weight layout is (in_features, out_features): x @ W == PyTorch x @ W.T."""
    D = gamma.shape[-1]
    H = b1.shape[-1]
    return (gamma.reshape(1, D).astype(jnp.float32),
            beta.reshape(1, D).astype(jnp.float32),
            w1.astype(jnp.bfloat16),
            b1.reshape(1, H).astype(jnp.float32),
            w2.astype(jnp.bfloat16),
            b2.reshape(1, D).astype(jnp.float32))


@functools.partial(jax.jit, static_argnames=("tm", "th", "vmem_cap"))
def _mlp_forward(x, gamma2d, beta2d, w1b, b1_2d, w2b, b2_2d, *, tm, th, vmem_cap):
    B, S, D = x.shape
    H = w1b.shape[1]
    tokens = B * S

    x2d = x.reshape(tokens, D)            # metadata-only reshape (row-major)
    n_i = pl.cdiv(tokens, tm)             # ragged last tile handled by Pallas masking
    n_k = H // th

    def const_spec(shape):
        return _spec(shape, lambda i, k: (0,) * len(shape), single_buffer=True)

    if n_k == 1:
        # Weights fully resident and never re-indexed -> single-buffer them too.
        w1_spec = _spec((D, th), lambda i, k: (0, 0), single_buffer=True)
        b1_spec = _spec((1, th), lambda i, k: (0, 0), single_buffer=True)
        w2_spec = _spec((th, D), lambda i, k: (0, 0), single_buffer=True)
    else:
        # H-tiled: slabs change every inner step -> keep default double buffering.
        w1_spec = pl.BlockSpec((D, th), lambda i, k: (0, k))
        b1_spec = pl.BlockSpec((1, th), lambda i, k: (0, k))
        w2_spec = pl.BlockSpec((th, D), lambda i, k: (k, 0))

    out2d = pl.pallas_call(
        mlp_kernel,
        out_shape=jax.ShapeDtypeStruct((tokens, D), x.dtype),
        grid_spec=pltpu.PrefetchScalarGridSpec(
            num_scalar_prefetch=0,
            grid=(n_i, n_k),
            in_specs=[
                pl.BlockSpec((tm, D), lambda i, k: (i, 0)),   # x token tile
                const_spec((1, D)),                           # LN gamma
                const_spec((1, D)),                           # LN beta
                w1_spec,                                      # W1 (bf16)
                b1_spec,                                      # b1
                w2_spec,                                      # W2 (bf16)
                const_spec((1, D)),                           # b2
            ],
            out_specs=pl.BlockSpec((tm, D), lambda i, k: (i, 0)),
            scratch_shapes=[
                pltpu.VMEM((tm, D), jnp.bfloat16),            # LayerNorm output
                pltpu.VMEM((tm, D), jnp.float32),             # output accumulator
            ],
        ),
        compiler_params=pltpu.CompilerParams(
            dimension_semantics=("parallel", "arbitrary"),
            vmem_limit_bytes=_vmem_limit_bytes(
                tm, D, H, th, n_k,
                x.dtype.itemsize, x.dtype.itemsize, vmem_cap)),
    )(x2d, gamma2d, beta2d, w1b, b1_2d, w2b, b2_2d)

    return out2d.reshape(B, S, D)


def mlp_forward(x, params, *, tm=None):
    """x: (B, S, D), params from prepare_params() -> (B, S, D).

    Note: passing x (and taking the output) in bf16 halves activation HBM
    traffic; the kernel upcasts to f32 for LayerNorm statistics either way."""
    gamma2d, beta2d, w1b, b1_2d, w2b, b2_2d = params
    B, S, D = x.shape
    H = w1b.shape[1]
    tokens = B * S

    vmem_cap = _tpu_vmem_capacity()
    if tm is None:
        # v5e/v6e (128 MiB VMEM): 512-row tiles; v7x (64 MiB/TC): 256-row tiles,
        # which also yields >=2 token tiles (both TensorCores busy) for tokens>=512.
        tm = 512 if vmem_cap >= 96 * 1024 * 1024 else 256
    tm = _round_up(min(tm, _round_up(tokens, 8)), 8)
    th = _choose_th(D, H, vmem_cap)

    return _mlp_forward(x, gamma2d, beta2d, w1b, b1_2d, w2b, b2_2d,
                        tm=tm, th=th, vmem_cap=vmem_cap)


def reference_forward(x, gamma, beta, w1, b1, w2, b2):
    """f32 reference matching the PyTorch module (exact erf GELU)."""
    xf = x.astype(jnp.float32)
    mean = jnp.mean(xf, axis=-1, keepdims=True)
    var = jnp.mean((xf - mean) ** 2, axis=-1, keepdims=True)
    xn = (xf - mean) * lax.rsqrt(var + 1e-5) * gamma + beta
    h = xn @ w1 + b1
    h = jax.nn.gelu(h, approximate=False)
    return (h @ w2 + b2).astype(x.dtype)


if __name__ == "__main__":
    # Small shapes consistent with the module: batch=2, seq=8,
    # embedding_dimension=128, mlp_units=256.
    B, S, D, H = 2, 8, 128, 256

    key = jax.random.PRNGKey(0)
    kx, kg, kbeta, kw1, kb1, kw2, kb2 = jax.random.split(key, 7)

    x = jax.random.normal(kx, (B, S, D), dtype=jnp.float32)

    gamma = 1.0 + 0.1 * jax.random.normal(kg, (D,), jnp.float32)
    beta = 0.1 * jax.random.normal(kbeta, (D,), jnp.float32)
    lim1 = 1.0 / jnp.sqrt(D)
    lim2 = 1.0 / jnp.sqrt(H)
    w1 = jax.random.uniform(kw1, (D, H), jnp.float32, -lim1, lim1)
    b1 = jax.random.uniform(kb1, (H,), jnp.float32, -lim1, lim1)
    w2 = jax.random.uniform(kw2, (H, D), jnp.float32, -lim2, lim2)
    b2 = jax.random.uniform(kb2, (D,), jnp.float32, -lim2, lim2)

    params = prepare_params(gamma, beta, w1, b1, w2, b2)   # once, at init
    out = mlp_forward(x, params)
    out = jax.block_until_ready(out)

    ref = reference_forward(x, gamma, beta, w1, b1, w2, b2)
    assert out.shape == (B, S, D)
    # Tolerance covers bf16 matmul operands + tanh-GELU vs the exact erf f32
    # reference (deliberate precision/speed tradeoff; accumulation stays f32).
    assert jnp.allclose(out, ref, atol=6e-2, rtol=6e-2), "mismatch vs reference"

    print("KERNEL_OK")
</pallas_src>

<mosaic_0001>
module attributes {stable_mosaic.version = 11 : i64} {
  func.func @mlp_kernel(%arg0: i32, %arg1: i32, %arg2: memref<16x128xf32, #tpu.memory_space<vmem>>, %arg3: memref<1x128xf32, #tpu.memory_space<vmem>>, %arg4: memref<1x128xf32, #tpu.memory_space<vmem>>, %arg5: memref<128x256xbf16, #tpu.memory_space<vmem>>, %arg6: memref<1x256xf32, #tpu.memory_space<vmem>>, %arg7: memref<256x128xbf16, #tpu.memory_space<vmem>>, %arg8: memref<1x128xf32, #tpu.memory_space<vmem>>, %arg9: memref<16x128xf32, #tpu.memory_space<vmem>>, %arg10: memref<16x128xbf16, #tpu.memory_space<vmem>>, %arg11: memref<16x128xf32, #tpu.memory_space<vmem>>) attributes {dimension_semantics = [#tpu.dimension_semantics<parallel>, #tpu.dimension_semantics<arbitrary>], iteration_bounds = array<i64: 1, 1>, scalar_prefetch = 0 : i64, scratch_operands = 2 : i64, tpu.core_type = #tpu.core_type<tc>, window_params = [{transform_indices = @transform_0, window_bounds = array<i64: 16, 128>}, {pipeline_mode = #tpu.pipeline_mode<synchronous>, transform_indices = @transform_1, window_bounds = array<i64: 1, 128>}, {pipeline_mode = #tpu.pipeline_mode<synchronous>, transform_indices = @transform_2, window_bounds = array<i64: 1, 128>}, {pipeline_mode = #tpu.pipeline_mode<synchronous>, transform_indices = @transform_3, window_bounds = array<i64: 128, 256>}, {pipeline_mode = #tpu.pipeline_mode<synchronous>, transform_indices = @transform_4, window_bounds = array<i64: 1, 256>}, {pipeline_mode = #tpu.pipeline_mode<synchronous>, transform_indices = @transform_5, window_bounds = array<i64: 256, 128>}, {pipeline_mode = #tpu.pipeline_mode<synchronous>, transform_indices = @transform_6, window_bounds = array<i64: 1, 128>}, {transform_indices = @transform_7, window_bounds = array<i64: 16, 128>}]} {
    %c0_i32 = arith.constant 0 : i32
    %0 = arith.cmpi eq, %arg1, %c0_i32 : i32
    %1 = arith.extui %0 : i1 to i32
    %c0_i32_0 = arith.constant 0 : i32
    %2 = arith.cmpi ne, %1, %c0_i32_0 : i32
    scf.if %2 {
      %c0_19 = arith.constant 0 : index
      %c0_20 = arith.constant 0 : index
      %31 = vector.load %arg2[%c0_19, %c0_20] : memref<16x128xf32, #tpu.memory_space<vmem>>, vector<16x128xf32>
      %cst_21 = arith.constant dense<0.000000e+00> : vector<16xf32>
      %32 = vector.multi_reduction <add>, %31, %cst_21 [1] : vector<16x128xf32> to vector<16xf32>
      %33 = vector.shape_cast %32 : vector<16xf32> to vector<16x1xf32>
      %cst_22 = arith.constant 1.280000e+02 : f32
      %34 = vector.broadcast %cst_22 : f32 to vector<16x1xf32>
      %35 = arith.divf %33, %34 : vector<16x1xf32>
      %36 = arith.mulf %31, %31 : vector<16x128xf32>
      %cst_23 = arith.constant dense<0.000000e+00> : vector<16xf32>
      %37 = vector.multi_reduction <add>, %36, %cst_23 [1] : vector<16x128xf32> to vector<16xf32>
      %38 = vector.shape_cast %37 : vector<16xf32> to vector<16x1xf32>
      %cst_24 = arith.constant 1.280000e+02 : f32
      %39 = vector.broadcast %cst_24 : f32 to vector<16x1xf32>
      %40 = arith.divf %38, %39 : vector<16x1xf32>
      %41 = arith.mulf %35, %35 : vector<16x1xf32>
      %42 = arith.subf %40, %41 : vector<16x1xf32>
      %cst_25 = arith.constant 0.000000e+00 : f32
      %43 = vector.broadcast %cst_25 : f32 to vector<16x1xf32>
      %44 = arith.maximumf %42, %43 : vector<16x1xf32>
      %45 = vector.broadcast %35 : vector<16x1xf32> to vector<16x128xf32>
      %46 = arith.subf %31, %45 : vector<16x128xf32>
      %cst_26 = arith.constant 9.99999974E-6 : f32
      %47 = vector.broadcast %cst_26 : f32 to vector<16x1xf32>
      %48 = arith.addf %44, %47 : vector<16x1xf32>
      %49 = math.rsqrt %48 : vector<16x1xf32>
      %50 = vector.broadcast %49 : vector<16x1xf32> to vector<16x128xf32>
      %51 = arith.mulf %46, %50 : vector<16x128xf32>
      %c0_27 = arith.constant 0 : index
      %c0_28 = arith.constant 0 : index
      %52 = vector.load %arg3[%c0_27, %c0_28] : memref<1x128xf32, #tpu.memory_space<vmem>>, vector<1x128xf32>
      %53 = vector.broadcast %52 : vector<1x128xf32> to vector<16x128xf32>
      %54 = arith.mulf %51, %53 : vector<16x128xf32>
      %c0_29 = arith.constant 0 : index
      %c0_30 = arith.constant 0 : index
      %55 = vector.load %arg4[%c0_29, %c0_30] : memref<1x128xf32, #tpu.memory_space<vmem>>, vector<1x128xf32>
      %56 = vector.broadcast %55 : vector<1x128xf32> to vector<16x128xf32>
      %57 = arith.addf %54, %56 : vector<16x128xf32>
      %58 = arith.truncf %57 : vector<16x128xf32> to vector<16x128xbf16>
      %c0_31 = arith.constant 0 : index
      %c0_32 = arith.constant 0 : index
      %59 = vector.load %arg10[%c0_31, %c0_32] : memref<16x128xbf16, #tpu.memory_space<vmem>>, vector<16x128xbf16>
      tpu.vector_store %arg10[%c0_31, %c0_32], %58 {strides = array<i32>} : memref<16x128xbf16, #tpu.memory_space<vmem>>, vector<16x128xbf16>,
      %cst_33 = arith.constant 0.000000e+00 : f32
      %60 = vector.broadcast %cst_33 : f32 to vector<16x128xf32>
      %c0_34 = arith.constant 0 : index
      %c0_35 = arith.constant 0 : index
      %61 = vector.load %arg11[%c0_34, %c0_35] : memref<16x128xf32, #tpu.memory_space<vmem>>, vector<16x128xf32>
      tpu.vector_store %arg11[%c0_34, %c0_35], %60 {strides = array<i32>} : memref<16x128xf32, #tpu.memory_space<vmem>>, vector<16x128xf32>,
    } else {
    }
    %c0 = arith.constant 0 : index
    %c0_1 = arith.constant 0 : index
    %3 = vector.load %arg10[%c0, %c0_1] : memref<16x128xbf16, #tpu.memory_space<vmem>>, vector<16x128xbf16>
    %c0_2 = arith.constant 0 : index
    %c0_3 = arith.constant 0 : index
    %4 = vector.load %arg5[%c0_2, %c0_3] : memref<128x256xbf16, #tpu.memory_space<vmem>>, vector<128x256xbf16>
    %cst = arith.constant dense<0.000000e+00> : vector<16x256xf32>
    %5 = tpu.matmul %3, %4, %cst {dimension_numbers = #tpu.dot_dimension_numbers<[1], [0], [0], [1], [0, 0, 1, 1], [], []>} : vector<16x128xbf16>, vector<128x256xbf16>, vector<16x256xf32> -> vector<16x256xf32>
    %c0_4 = arith.constant 0 : index
    %c0_5 = arith.constant 0 : index
    %6 = vector.load %arg6[%c0_4, %c0_5] : memref<1x256xf32, #tpu.memory_space<vmem>>, vector<1x256xf32>
    %7 = vector.broadcast %6 : vector<1x256xf32> to vector<16x256xf32>
    %8 = arith.addf %5, %7 : vector<16x256xf32>
    %9 = arith.mulf %8, %8 : vector<16x256xf32>
    %10 = arith.mulf %8, %9 : vector<16x256xf32>
    %cst_6 = arith.constant 4.471500e-02 : f32
    %11 = vector.broadcast %cst_6 : f32 to vector<16x256xf32>
    %12 = arith.mulf %11, %10 : vector<16x256xf32>
    %13 = arith.addf %8, %12 : vector<16x256xf32>
    %cst_7 = arith.constant 0.797884583 : f32
    %14 = vector.broadcast %cst_7 : f32 to vector<16x256xf32>
    %15 = arith.mulf %14, %13 : vector<16x256xf32>
    %16 = math.tanh %15 : vector<16x256xf32>
    %cst_8 = arith.constant 1.000000e+00 : f32
    %17 = vector.broadcast %cst_8 : f32 to vector<16x256xf32>
    %18 = arith.addf %17, %16 : vector<16x256xf32>
    %cst_9 = arith.constant 5.000000e-01 : f32
    %19 = vector.broadcast %cst_9 : f32 to vector<16x256xf32>
    %20 = arith.mulf %19, %18 : vector<16x256xf32>
    %21 = arith.mulf %8, %20 : vector<16x256xf32>
    %c0_10 = arith.constant 0 : index
    %c0_11 = arith.constant 0 : index
    %22 = vector.load %arg11[%c0_10, %c0_11] : memref<16x128xf32, #tpu.memory_space<vmem>>, vector<16x128xf32>
    %23 = arith.truncf %21 : vector<16x256xf32> to vector<16x256xbf16>
    %c0_12 = arith.constant 0 : index
    %c0_13 = arith.constant 0 : index
    %24 = vector.load %arg7[%c0_12, %c0_13] : memref<256x128xbf16, #tpu.memory_space<vmem>>, vector<256x128xbf16>
    %cst_14 = arith.constant dense<0.000000e+00> : vector<16x128xf32>
    %25 = tpu.matmul %23, %24, %cst_14 {dimension_numbers = #tpu.dot_dimension_numbers<[1], [0], [0], [1], [0, 0, 1, 1], [], []>} : vector<16x256xbf16>, vector<256x128xbf16>, vector<16x128xf32> -> vector<16x128xf32>
    %26 = arith.addf %22, %25 : vector<16x128xf32>
    %c0_15 = arith.constant 0 : index
    %c0_16 = arith.constant 0 : index
    %27 = vector.load %arg11[%c0_15, %c0_16] : memref<16x128xf32, #tpu.memory_space<vmem>>, vector<16x128xf32>
    tpu.vector_store %arg11[%c0_15, %c0_16], %26 {strides = array<i32>} : memref<16x128xf32, #tpu.memory_space<vmem>>, vector<16x128xf32>,
    %c0_i32_17 = arith.constant 0 : i32
    %28 = arith.cmpi eq, %arg1, %c0_i32_17 : i32
    %29 = arith.extui %28 : i1 to i32
    %c0_i32_18 = arith.constant 0 : i32
    %30 = arith.cmpi ne, %29, %c0_i32_18 : i32
    scf.if %30 {
      %c0_19 = arith.constant 0 : index
      %c0_20 = arith.constant 0 : index
      %31 = vector.load %arg11[%c0_19, %c0_20] : memref<16x128xf32, #tpu.memory_space<vmem>>, vector<16x128xf32>
      %c0_21 = arith.constant 0 : index
      %c0_22 = arith.constant 0 : index
      %32 = vector.load %arg8[%c0_21, %c0_22] : memref<1x128xf32, #tpu.memory_space<vmem>>, vector<1x128xf32>
      %33 = vector.broadcast %32 : vector<1x128xf32> to vector<16x128xf32>
      %34 = arith.addf %31, %33 : vector<16x128xf32>
      %c0_23 = arith.constant 0 : index
      %c0_24 = arith.constant 0 : index
      %35 = vector.load %arg9[%c0_23, %c0_24] : memref<16x128xf32, #tpu.memory_space<vmem>>, vector<16x128xf32>
      tpu.vector_store %arg9[%c0_23, %c0_24], %34 {strides = array<i32>} : memref<16x128xf32, #tpu.memory_space<vmem>>, vector<16x128xf32>,
    } else {
    }
    return
  }
  func.func @transform_0(%arg0: i32, %arg1: i32) -> (i32, i32) {
    %c0_i32 = arith.constant 0 : i32
    %c0_i32_0 = arith.constant 0 : i32
    return %arg0, %c0_i32 : i32, i32
  }
  func.func @transform_1(%arg0: i32, %arg1: i32) -> (i32, i32) {
    %c0_i32 = arith.constant 0 : i32
    %c0_i32_0 = arith.constant 0 : i32
    %c0_i32_1 = arith.constant 0 : i32
    return %c0_i32, %c0_i32_0 : i32, i32
  }
  func.func @transform_2(%arg0: i32, %arg1: i32) -> (i32, i32) {
    %c0_i32 = arith.constant 0 : i32
    %c0_i32_0 = arith.constant 0 : i32
    %c0_i32_1 = arith.constant 0 : i32
    return %c0_i32, %c0_i32_0 : i32, i32
  }
  func.func @transform_3(%arg0: i32, %arg1: i32) -> (i32, i32) {
    %c0_i32 = arith.constant 0 : i32
    %c0_i32_0 = arith.constant 0 : i32
    %c0_i32_1 = arith.constant 0 : i32
    return %c0_i32, %c0_i32_0 : i32, i32
  }
  func.func @transform_4(%arg0: i32, %arg1: i32) -> (i32, i32) {
    %c0_i32 = arith.constant 0 : i32
    %c0_i32_0 = arith.constant 0 : i32
    %c0_i32_1 = arith.constant 0 : i32
    return %c0_i32, %c0_i32_0 : i32, i32
  }
  func.func @transform_5(%arg0: i32, %arg1: i32) -> (i32, i32) {
    %c0_i32 = arith.constant 0 : i32
    %c0_i32_0 = arith.constant 0 : i32
    %c0_i32_1 = arith.constant 0 : i32
    return %c0_i32, %c0_i32_0 : i32, i32
  }
  func.func @transform_6(%arg0: i32, %arg1: i32) -> (i32, i32) {
    %c0_i32 = arith.constant 0 : i32
    %c0_i32_0 = arith.constant 0 : i32
    %c0_i32_1 = arith.constant 0 : i32
    return %c0_i32, %c0_i32_0 : i32, i32
  }
  func.func @transform_7(%arg0: i32, %arg1: i32) -> (i32, i32) {
    %c0_i32 = arith.constant 0 : i32
    %c0_i32_0 = arith.constant 0 : i32
    return %arg0, %c0_i32 : i32, i32
  }
}

</mosaic_0001>

<llo_original>
// kernel: _mlp_forward.1
$region0: #{_mlp_forward.1}
  #allocation0 [shape = 'u32[]', space=smem, size = 0x4, offset = 0x4, fixed_abs, tag = 'smem constant byte address 0x4 - core index']
  #allocation1 [shape = 'u32[144,128]{1,0:T(1,128)}', space=vmem, size = 0x12000, scoped, tag = 'internal scratch']
  #allocation2 [shape = 'bf16[16,128]{1,0:T(8,128)(2,1)}', space=vmem, size = 0x1000, scoped, tag = 'scratch operand']
  #allocation3 [shape = 'f32[16,128]{1,0:T(8,128)}', space=vmem, size = 0x2000, scoped, tag = 'scratch operand']
  %s0 = inlined_call_operand.hbm [shape: f32[16,128], index: 0, kind: input, shape index: {}]
  %s1 = inlined_call_operand.vmem [shape: f32[1,128], index: 1, kind: input, shape index: {}]
  %s2 = inlined_call_operand.vmem [shape: f32[1,128], index: 2, kind: input, shape index: {}]
  %s3 = inlined_call_operand.hbm [shape: bf16[128,256], index: 3, kind: input, shape index: {}]
  %s4 = inlined_call_operand.vmem [shape: f32[1,256], index: 4, kind: input, shape index: {}]
  %s5 = inlined_call_operand.hbm [shape: bf16[256,128], index: 5, kind: input, shape index: {}]
  %s6 = inlined_call_operand.vmem [shape: f32[1,128], index: 6, kind: input, shape index: {}]
  %s7 = inlined_call_operand.hbm [shape: f32[16,128], index: 7, kind: output, shape index: {}]
  %s8 = sld [smem:[#allocation0]]
  $region58: #{_mlp_forward.1} parent=0
    _
  %s10 = ssub.s32 1, %s8
  %s11 = scalar_select 0, %s10, %s8
  $region1: #{_mlp_forward.1} parent=0
    #allocation4 [shape = 'u8[8192]{0}', space=vmem, size = 0x2000, scoped, tag = 'input window, operand 0, single buffered']
    #allocation5 [shape = 's32[1]{0}', space=sflag, size = 0x4, scoped, tag = 'scoped memory for _mlp_forward.1']
    #allocation6 [shape = 's32[1]{0}', space=sflag, size = 0x4, scoped, tag = 'scoped memory for _mlp_forward.1']
    #allocation7 [shape = 'u8[65536]{0}', space=vmem, size = 0x10000, scoped, tag = 'input window, operand 3, single buffered']
    #allocation8 [shape = 's32[1]{0}', space=sflag, size = 0x4, scoped, tag = 'scoped memory for _mlp_forward.1']
    #allocation9 [shape = 'u8[65536]{0}', space=vmem, size = 0x10000, scoped, tag = 'input window, operand 5, single buffered']
    #allocation10 [shape = 'u8[8192]{0}', space=vmem, size = 0x2000, scoped, tag = 'output window, operand 0, single buffered']
    %12 = vsyncpa [#allocation5], 0
    %13 = vsyncpa [#allocation8], 0
    %14 = vsyncpa [#allocation6], 0
    // Predicated region
    $region2: #{_mlp_forward.1} parent=1 // pred_check
      _
    $region3: #{_mlp_forward.1} parent=1 // pred_check_branch
      %16 = sbr.rel (0) target = $region5
    $region4: #{_mlp_forward.1} parent=1 // pred_region
      %s18 = ssub.s32 256, 256
      %19 = vsyncadd [#allocation5], %s18
      %s20 = sshll.u32 [#allocation4], 4
      %s21 = int_to_ptr.vmem [resolvable:$true] %s20
      %26 = dma.hbm_to_vmem [thread:$0]  %s0, 256, %s21, [#allocation5], 128, 128, 8
    $region5: #{_mlp_forward.1} parent=1 // pred_fallthru
      _
    // Predicated region
    $region6: #{_mlp_forward.1} parent=1 // pred_check
      _
    $region7: #{_mlp_forward.1} parent=1 // pred_check_branch
      %28 = sbr.rel (0) target = $region9
    $region8: #{_mlp_forward.1} parent=1 // pred_region
      _
    $region9: #{_mlp_forward.1} parent=1 // pred_fallthru
      _
    // Predicated region
    $region10: #{_mlp_forward.1} parent=1 // pred_check
      _
    $region11: #{_mlp_forward.1} parent=1 // pred_check_branch
      %30 = sbr.rel (0) target = $region13
    $region12: #{_mlp_forward.1} parent=1 // pred_region
      _
    $region13: #{_mlp_forward.1} parent=1 // pred_fallthru
      _
    // Predicated region
    $region14: #{_mlp_forward.1} parent=1 // pred_check
      _
    $region15: #{_mlp_forward.1} parent=1 // pred_check_branch
      %32 = sbr.rel (0) target = $region17
    $region16: #{_mlp_forward.1} parent=1 // pred_region
      %s34 = ssub.s32 2048, 2048
      %35 = vsyncadd [#allocation8], %s34
      %s36 = sshll.u32 [#allocation7], 4
      %s37 = int_to_ptr.vmem [resolvable:$true] %s36
      %42 = dma.hbm_to_vmem [thread:$0]  %s3, 2048, %s37, [#allocation8], 128, 128, 8
    $region17: #{_mlp_forward.1} parent=1 // pred_fallthru
      _
    // Predicated region
    $region18: #{_mlp_forward.1} parent=1 // pred_check
      _
    $region19: #{_mlp_forward.1} parent=1 // pred_check_branch
      %44 = sbr.rel (0) target = $region21
    $region20: #{_mlp_forward.1} parent=1 // pred_region
      _
    $region21: #{_mlp_forward.1} parent=1 // pred_fallthru
      _
    // Predicated region
    $region22: #{_mlp_forward.1} parent=1 // pred_check
      _
    $region23: #{_mlp_forward.1} parent=1 // pred_check_branch
      %46 = sbr.rel (0) target = $region25
    $region24: #{_mlp_forward.1} parent=1 // pred_region
      %s48 = ssub.s32 2048, 2048
      %49 = vsyncadd [#allocation8], %s48
      %s50 = sshll.u32 [#allocation9], 4
      %s51 = int_to_ptr.vmem [resolvable:$true] %s50
      %56 = dma.hbm_to_vmem [thread:$0]  %s5, 2048, %s51, [#allocation8], 64, 64, 4
    $region25: #{_mlp_forward.1} parent=1 // pred_fallthru
      _
    // Predicated region
    $region26: #{_mlp_forward.1} parent=1 // pred_check
      _
    $region27: #{_mlp_forward.1} parent=1 // pred_check_branch
      %58 = sbr.rel (0) target = $region29
    $region28: #{_mlp_forward.1} parent=1 // pred_region
      _
    $region29: #{_mlp_forward.1} parent=1 // pred_fallthru
      _
    // Predicated region
    $region30: #{_mlp_forward.1} parent=1 // pred_check
      _
    $region31: #{_mlp_forward.1} parent=1 // pred_check_branch
      %60 = sbr.rel (0) target = $region33
    $region32: #{_mlp_forward.1} parent=1 // pred_region
      %61 = dma.done [#allocation5], 256
    $region33: #{_mlp_forward.1} parent=1 // pred_fallthru
      _
    // Predicated region
    $region34: #{_mlp_forward.1} parent=1 // pred_check
      _
    $region35: #{_mlp_forward.1} parent=1 // pred_check_branch
      %63 = sbr.rel (0) target = $region37
    $region36: #{_mlp_forward.1} parent=1 // pred_region
      %64 = dma.done [#allocation8], 2048
    $region37: #{_mlp_forward.1} parent=1 // pred_fallthru
      _
    // Predicated region
    $region38: #{_mlp_forward.1} parent=1 // pred_check
      _
    $region39: #{_mlp_forward.1} parent=1 // pred_check_branch
      %66 = sbr.rel (0) target = $region41
    $region40: #{_mlp_forward.1} parent=1 // pred_region
      %67 = dma.done [#allocation8], 2048
    $region41: #{_mlp_forward.1} parent=1 // pred_fallthru
      _
    %p69 = scmp.eq.s32.totalorder 0, 0
    // Predicated region
    $region42: #{_mlp_forward.1} parent=1 // pred_check
      %p70 = pneg %p69
    $region43: #{_mlp_forward.1} parent=1 // pred_check_branch
      %72 = sbr.rel (%p70) target = $region45
    $region44: #{_mlp_forward.1} parent=1 // pred_region
      %v73 = vld [vmem:[#allocation4] sm:$0xff]
      %v74 = vld [vmem:[#allocation4 + $0x8] sm:$0xff]
      %75 = vadd.xlane.f32.xlu0 %v73
      %v76 = vpop.xlane.xlu0 %75
      %77 = vadd.xlane.f32.xlu0 %v74
      %v78 = vpop.xlane.xlu0 %77
      %v79 = vrcp.pop 128.0
      %v80 = vmul.f32 %v76, %v79
      %v81 = vmul.f32 %v78, %v79
      %v82 = vmul.f32 %v73, %v73
      %v83 = vmul.f32 %v74, %v74
      %84 = vadd.xlane.f32.xlu0 %v82
      %v85 = vpop.xlane.xlu0 %84
      %86 = vadd.xlane.f32.xlu0 %v83
      %v87 = vpop.xlane.xlu0 %86
      %v88 = vmul.f32 %v85, %v79
      %v89 = vmul.f32 %v87, %v79
      %v90 = vmul.f32 %v80, %v80
      %v91 = vmul.f32 %v81, %v81
      %v92 = vsub.f32 %v88, %v90
      %v93 = vsub.f32 %v89, %v91
      %v94 = vmax.f32 %v92, 0.0
      %v95 = vmax.f32 %v93, 0.0
      %v96 = vsub.f32 %v73, %v80
      %v97 = vsub.f32 %v74, %v81
      %v98 = vadd.f32 %v94, 1e-05
      %v99 = vadd.f32 %v95, 1e-05
      %v100 = vrsqrt.pop %v98
      %v101 = vrsqrt.pop %v99
      %v102 = vmul.f32 %v96, %v100
      %v103 = vmul.f32 %v97, %v101
      %v104 = vld [vmem:[%s1] sm:$0x1]
      %v106 = vlaneseq
      %v107 = vshrl.u32 %v106, 7
      %v108 = vsub.s32 0, %v107
      %v109 = vrot.slane %v104, %v108
      %v111 = vmul.f32 %v102, %v109
      %v112 = vmul.f32 %v103, %v109
      %v113 = vld [vmem:[%s2] sm:$0x1]
      %v115 = vlaneseq
      %v116 = vshrl.u32 %v115, 7
      %v117 = vsub.s32 0, %v116
      %v118 = vrot.slane %v113, %v117
      %v120 = vadd.f32 %v111, %v118
      %v121 = vadd.f32 %v112, %v118
      %v122 = vpack.c.bf16 %v121, %v120
      %v124 = vunpack.c.l.b16 %v122
      %v125 = vunpack.c.h.b16 %v122
      %v126 = vpack.c.b16 %v124, %v124
      %v127 = vpack.c.b16 %v125, %v125
      %130 = vst [vmem:[#allocation2] sm:$0xf] %v126
      %131 = vst [vmem:[#allocation2 + $0x4] sm:$0xf] %v127
      %132 = vst [vmem:[#allocation3] sm:$0xff] 0.0
      %133 = vst [vmem:[#allocation3 + $0x8] sm:$0xff] 0.0
    $region45: #{_mlp_forward.1} parent=1 // pred_fallthru
      _
    %v134 = vld [vmem:[#allocation2] sm:$0xf]
    %v135 = vld [vmem:[#allocation2 + $0x4] sm:$0xf]
    %v136 = vld [vmem:[#allocation7] sm:$0xff]
    %v137 = vld [vmem:[#allocation7 + $0x8] sm:$0xff]
    %v138 = vld [vmem:[#allocation7 + $0x10] sm:$0xff]
    %v139 = vld [vmem:[#allocation7 + $0x18] sm:$0xff]
    %v140 = vld [vmem:[#allocation7 + $0x20] sm:$0xff]
    %v141 = vld [vmem:[#allocation7 + $0x28] sm:$0xff]
    %v142 = vld [vmem:[#allocation7 + $0x30] sm:$0xff]
    %v143 = vld [vmem:[#allocation7 + $0x38] sm:$0xff]
    %v144 = vld [vmem:[#allocation7 + $0x40] sm:$0xff]
    %v145 = vld [vmem:[#allocation7 + $0x48] sm:$0xff]
    %v146 = vld [vmem:[#allocation7 + $0x50] sm:$0xff]
    %v147 = vld [vmem:[#allocation7 + $0x58] sm:$0xff]
    %v148 = vld [vmem:[#allocation7 + $0x60] sm:$0xff]
    %v149 = vld [vmem:[#allocation7 + $0x68] sm:$0xff]
    %v150 = vld [vmem:[#allocation7 + $0x70] sm:$0xff]
    %v151 = vld [vmem:[#allocation7 + $0x78] sm:$0xff]
    %v152 = vld [vmem:[%s4] sm:$0x3]
    %v154 = vlaneseq
    %v155 = vshrl.u32 %v154, 7
    %v156 = vsub.s32 0, %v155
    %v157 = vrot.slane %v152, %v156
    %v158 = vlaneseq
    %v159 = vshrl.u32 %v158, 7
    %v160 = vsub.s32 1, %v159
    %v161 = vrot.slane %v152, %v160
    %v166 = vunpack.c.l.b16 %v134
    %v167 = vunpack.c.l.b16 %v135
    %v168 = vpack.c.b16 %v167, %v166
    %v186 = vunpack.c.l.b16 %v136
    %v187 = vunpack.c.h.b16 %v136
    %v188 = vunpack.c.l.b16 %v137
    %v189 = vunpack.c.h.b16 %v137
    %v190 = vunpack.c.l.b16 %v138
    %v191 = vunpack.c.h.b16 %v138
    %v192 = vunpack.c.l.b16 %v139
    %v193 = vunpack.c.h.b16 %v139
    %v194 = vunpack.c.l.b16 %v140
    %v195 = vunpack.c.h.b16 %v140
    %v196 = vunpack.c.l.b16 %v141
    %v197 = vunpack.c.h.b16 %v141
    %v198 = vunpack.c.l.b16 %v142
    %v199 = vunpack.c.h.b16 %v142
    %v200 = vunpack.c.l.b16 %v143
    %v201 = vunpack.c.h.b16 %v143
    %v202 = vunpack.c.l.b16 %v144
    %v203 = vunpack.c.h.b16 %v144
    %v204 = vunpack.c.l.b16 %v145
    %v205 = vunpack.c.h.b16 %v145
    %v206 = vunpack.c.l.b16 %v146
    %v207 = vunpack.c.h.b16 %v146
    %v208 = vunpack.c.l.b16 %v147
    %v209 = vunpack.c.h.b16 %v147
    %v210 = vunpack.c.l.b16 %v148
    %v211 = vunpack.c.h.b16 %v148
    %v212 = vunpack.c.l.b16 %v149
    %v213 = vunpack.c.h.b16 %v149
    %v214 = vunpack.c.l.b16 %v150
    %v215 = vunpack.c.h.b16 %v150
    %v216 = vunpack.c.l.b16 %v151
    %v217 = vunpack.c.h.b16 %v151
    %v218 = vpack.c.b16 %v188, %v186
    %v219 = vpack.c.b16 %v189, %v187
    %v220 = vpack.c.b16 %v192, %v190
    %v221 = vpack.c.b16 %v193, %v191
    %v222 = vpack.c.b16 %v196, %v194
    %v223 = vpack.c.b16 %v197, %v195
    %v224 = vpack.c.b16 %v200, %v198
    %v225 = vpack.c.b16 %v201, %v199
    %v226 = vpack.c.b16 %v204, %v202
    %v227 = vpack.c.b16 %v205, %v203
    %v228 = vpack.c.b16 %v208, %v206
    %v229 = vpack.c.b16 %v209, %v207
    %v230 = vpack.c.b16 %v212, %v210
    %v231 = vpack.c.b16 %v213, %v211
    %v232 = vpack.c.b16 %v216, %v214
    %v233 = vpack.c.b16 %v217, %v215
    %250 = vmatprep.subr.bf16.mxu0 %v233
    %251 = vmatpush1.bf16.msra.mxu0 %v232
    %252 = vmatprep.subr.bf16.mxu0 %v231
    %253 = vmatpush1.bf16.msra.mxu0 %v230
    %254 = vmatprep.subr.bf16.mxu0 %v229
    %255 = vmatpush1.bf16.msra.mxu0 %v228
    %256 = vmatprep.subr.bf16.mxu0 %v227
    %257 = vmatpush1.bf16.msra.mxu0 %v226
    %258 = vmatprep.subr.bf16.mxu0 %v225
    %259 = vmatpush1.bf16.msra.mxu0 %v224
    %260 = vmatprep.subr.bf16.mxu0 %v223
    %261 = vmatpush1.bf16.msra.mxu0 %v222
    %262 = vmatprep.subr.bf16.mxu0 %v221
    %263 = vmatpush1.bf16.msra.mxu0 %v220
    %264 = vmatprep.subr.bf16.mxu0 %v219
    %265 = vmatpush1.bf16.msra.mxu0 %v218
    %266 = vmatprep.subr.bf16.mxu0 0
    %267 = vmatpush2.bf16.msra.mxu0 0
    %268 = vmatprep.subr.bf16.mxu0 0
    %269 = vmatpush2.bf16.msra.mxu0 0
    %270 = vmatprep.subr.bf16.mxu0 0
    %271 = vmatpush2.bf16.msra.mxu0 0
    %272 = vmatprep.subr.bf16.mxu0 0
    %273 = vmatpush2.bf16.msra.mxu0 0
    %274 = vmatprep.subr.bf16.mxu0 0
    %275 = vmatpush2.bf16.msra.mxu0 0
    %276 = vmatprep.subr.bf16.mxu0 0
    %277 = vmatpush2.bf16.msra.mxu0 0
    %278 = vmatprep.subr.bf16.mxu0 0
    %279 = vmatpush2.bf16.msra.mxu0 0
    %280 = vmatprep.subr.bf16.mxu0 0
    %281 = vmatpush2.bf16.msra.mxu0 0
    %282 = vmatprep.mubr.bf16.mxu0 0
    %283 = vmatmul.mubr.bf16.gmra.mxu0 %v168
    %v284 = vpop.f32.mrf.mxu0
    %v285 = vadd.f32 %v157, %v284
    %v286 = vpop.f32.mrf.mxu0
    %v287 = vadd.f32 %v161, %v286
    %v288 = vpop.f32.mrf.mxu0
    %v289 = vadd.f32 %v157, %v288
    %v290 = vpop.f32.mrf.mxu0
    %v291 = vadd.f32 %v161, %v290
    %292 = vdwg.mxu0
    %v293 = vmul.f32 %v285, %v285
    %v294 = vmul.f32 %v287, %v287
    %v295 = vmul.f32 %v289, %v289
    %v296 = vmul.f32 %v291, %v291
    %v297 = vmul.f32 %v285, %v293
    %v298 = vmul.f32 %v287, %v294
    %v299 = vmul.f32 %v289, %v295
    %v300 = vmul.f32 %v291, %v296
    %v301 = vmul.f32 %v297, 0.044715
    %v302 = vmul.f32 %v298, 0.044715
    %v303 = vmul.f32 %v299, 0.044715
    %v304 = vmul.f32 %v300, 0.044715
    %v305 = vadd.f32 %v285, %v301
    %v306 = vadd.f32 %v287, %v302
    %v307 = vadd.f32 %v289, %v303
    %v308 = vadd.f32 %v291, %v304
    %v309 = vmul.f32 %v305, 0.7978846
    %v310 = vmul.f32 %v306, 0.7978846
    %v311 = vmul.f32 %v307, 0.7978846
    %v312 = vmul.f32 %v308, 0.7978846
    %v313 = vtanh.pop %v309
    %v314 = vtanh.pop %v310
    %v315 = vtanh.pop %v311
    %v316 = vtanh.pop %v312
    %v317 = vadd.f32 %v313, 1.0
    %v318 = vadd.f32 %v314, 1.0
    %v319 = vadd.f32 %v315, 1.0
    %v320 = vadd.f32 %v316, 1.0
    %v321 = vmul.f32 %v317, 0.5
    %v322 = vmul.f32 %v318, 0.5
    %v323 = vmul.f32 %v319, 0.5
    %v324 = vmul.f32 %v320, 0.5
    %v325 = vmul.f32 %v285, %v321
    %v326 = vmul.f32 %v287, %v322
    %v327 = vmul.f32 %v289, %v323
    %v328 = vmul.f32 %v291, %v324
    %v329 = vld [vmem:[#allocation3] sm:$0xff]
    %v330 = vld [vmem:[#allocation3 + $0x8] sm:$0xff]
    %v331 = vpack.c.bf16 %v327, %v325
    %v332 = vpack.c.bf16 %v328, %v326
    %v333 = vld [vmem:[#allocation9] sm:$0xf]
    %v334 = vld [vmem:[#allocation9 + $0x4] sm:$0xf]
    %v335 = vld [vmem:[#allocation9 + $0x8] sm:$0xf]
    %v336 = vld [vmem:[#allocation9 + $0xc] sm:$0xf]
    %v337 = vld [vmem:[#allocation9 + $0x10] sm:$0xf]
    %v338 = vld [vmem:[#allocation9 + $0x14] sm:$0xf]
    %v339 = vld [vmem:[#allocation9 + $0x18] sm:$0xf]
    %v340 = vld [vmem:[#allocation9 + $0x1c] sm:$0xf]
    %v341 = vld [vmem:[#allocation9 + $0x20] sm:$0xf]
    %v342 = vld [vmem:[#allocation9 + $0x24] sm:$0xf]
    %v343 = vld [vmem:[#allocation9 + $0x28] sm:$0xf]
    %v344 = vld [vmem:[#allocation9 + $0x2c] sm:$0xf]
    %v345 = vld [vmem:[#allocation9 + $0x30] sm:$0xf]
    %v346 = vld [vmem:[#allocation9 + $0x34] sm:$0xf]
    %v347 = vld [vmem:[#allocation9 + $0x38] sm:$0xf]
    %v348 = vld [vmem:[#allocation9 + $0x3c] sm:$0xf]
    %v349 = vld [vmem:[#allocation9 + $0x40] sm:$0xf]
    %v350 = vld [vmem:[#allocation9 + $0x44] sm:$0xf]
    %v351 = vld [vmem:[#allocation9 + $0x48] sm:$0xf]
    %v352 = vld [vmem:[#allocation9 + $0x4c] sm:$0xf]
    %v353 = vld [vmem:[#allocation9 + $0x50] sm:$0xf]
    %v354 = vld [vmem:[#allocation9 + $0x54] sm:$0xf]
    %v355 = vld [vmem:[#allocation9 + $0x58] sm:$0xf]
    %v356 = vld [vmem:[#allocation9 + $0x5c] sm:$0xf]
    %v357 = vld [vmem:[#allocation9 + $0x60] sm:$0xf]
    %v358 = vld [vmem:[#allocation9 + $0x64] sm:$0xf]
    %v359 = vld [vmem:[#allocation9 + $0x68] sm:$0xf]
    %v360 = vld [vmem:[#allocation9 + $0x6c] sm:$0xf]
    %v361 = vld [vmem:[#allocation9 + $0x70] sm:$0xf]
    %v362 = vld [vmem:[#allocation9 + $0x74] sm:$0xf]
    %v363 = vld [vmem:[#allocation9 + $0x78] sm:$0xf]
    %v364 = vld [vmem:[#allocation9 + $0x7c] sm:$0xf]
    %v397 = vunpack.c.l.b16 %v333
    %v398 = vunpack.c.l.b16 %v334
    %v399 = vunpack.c.l.b16 %v335
    %v400 = vunpack.c.l.b16 %v336
    %v401 = vunpack.c.l.b16 %v337
    %v402 = vunpack.c.l.b16 %v338
    %v403 = vunpack.c.l.b16 %v339
    %v404 = vunpack.c.l.b16 %v340
    %v405 = vunpack.c.l.b16 %v341
    %v406 = vunpack.c.l.b16 %v342
    %v407 = vunpack.c.l.b16 %v343
    %v408 = vunpack.c.l.b16 %v344
    %v409 = vunpack.c.l.b16 %v345
    %v410 = vunpack.c.l.b16 %v346
    %v411 = vunpack.c.l.b16 %v347
    %v412 = vunpack.c.l.b16 %v348
    %v413 = vunpack.c.l.b16 %v349
    %v414 = vunpack.c.l.b16 %v350
    %v415 = vunpack.c.l.b16 %v351
    %v416 = vunpack.c.l.b16 %v352
    %v417 = vunpack.c.l.b16 %v353
    %v418 = vunpack.c.l.b16 %v354
    %v419 = vunpack.c.l.b16 %v355
    %v420 = vunpack.c.l.b16 %v356
    %v421 = vunpack.c.l.b16 %v357
    %v422 = vunpack.c.l.b16 %v358
    %v423 = vunpack.c.l.b16 %v359
    %v424 = vunpack.c.l.b16 %v360
    %v425 = vunpack.c.l.b16 %v361
    %v426 = vunpack.c.l.b16 %v362
    %v427 = vunpack.c.l.b16 %v363
    %v428 = vunpack.c.l.b16 %v364
    %v429 = vpack.c.b16 %v398, %v397
    %v430 = vpack.c.b16 %v400, %v399
    %v431 = vpack.c.b16 %v402, %v401
    %v432 = vpack.c.b16 %v404, %v403
    %v433 = vpack.c.b16 %v406, %v405
    %v434 = vpack.c.b16 %v408, %v407
    %v435 = vpack.c.b16 %v410, %v409
    %v436 = vpack.c.b16 %v412, %v411
    %v437 = vpack.c.b16 %v414, %v413
    %v438 = vpack.c.b16 %v416, %v415
    %v439 = vpack.c.b16 %v418, %v417
    %v440 = vpack.c.b16 %v420, %v419
    %v441 = vpack.c.b16 %v422, %v421
    %v442 = vpack.c.b16 %v424, %v423
    %v443 = vpack.c.b16 %v426, %v425
    %v444 = vpack.c.b16 %v428, %v427
    %461 = vmatprep.subr.bf16.mxu0 0
    %462 = vmatpush1.bf16.msra.mxu0 %v436
    %463 = vmatprep.subr.bf16.mxu0 0
    %464 = vmatpush1.bf16.msra.mxu0 %v435
    %465 = vmatprep.subr.bf16.mxu0 0
    %466 = vmatpush1.bf16.msra.mxu0 %v434
    %467 = vmatprep.subr.bf16.mxu0 0
    %468 = vmatpush1.bf16.msra.mxu0 %v433
    %469 = vmatprep.subr.bf16.mxu0 0
    %470 = vmatpush1.bf16.msra.mxu0 %v432
    %471 = vmatprep.subr.bf16.mxu0 0
    %472 = vmatpush1.bf16.msra.mxu0 %v431
    %473 = vmatprep.subr.bf16.mxu0 0
    %474 = vmatpush1.bf16.msra.mxu0 %v430
    %475 = vmatprep.subr.bf16.mxu0 0
    %476 = vmatpush1.bf16.msra.mxu0 %v429
    %477 = vmatprep.subr.bf16.mxu0 0
    %478 = vmatpush2.bf16.msra.mxu0 %v444
    %479 = vmatprep.subr.bf16.mxu0 0
    %480 = vmatpush2.bf16.msra.mxu0 %v443
    %481 = vmatprep.subr.bf16.mxu0 0
    %482 = vmatpush2.bf16.msra.mxu0 %v442
    %483 = vmatprep.subr.bf16.mxu0 0
    %484 = vmatpush2.bf16.msra.mxu0 %v441
    %485 = vmatprep.subr.bf16.mxu0 0
    %486 = vmatpush2.bf16.msra.mxu0 %v440
    %487 = vmatprep.subr.bf16.mxu0 0
    %488 = vmatpush2.bf16.msra.mxu0 %v439
    %489 = vmatprep.subr.bf16.mxu0 0
    %490 = vmatpush2.bf16.msra.mxu0 %v438
    %491 = vmatprep.subr.bf16.mxu0 0
    %492 = vmatpush2.bf16.msra.mxu0 %v437
    %493 = vmatprep.mubr.bf16.mxu0 %v332
    %494 = vmatmul.mubr.bf16.gmra.mxu0 %v331
    %v495 = vpop.f32.mrf.mxu0
    %v496 = vadd.f32 0.0, %v495
    %v497 = vpop.f32.mrf.mxu0
    %v498 = vpop.f32.mrf.mxu0
    %v499 = vadd.f32 0.0, %v498
    %v500 = vpop.f32.mrf.mxu0
    %501 = vdwg.mxu0
    %v502 = vadd.f32 %v329, %v496
    %v503 = vadd.f32 %v330, %v499
    %504 = vst [vmem:[#allocation3] sm:$0xff] %v502
    %505 = vst [vmem:[#allocation3 + $0x8] sm:$0xff] %v503
    // Predicated region
    $region46: #{_mlp_forward.1} parent=1 // pred_check
      %p506 = pneg %p69
    $region47: #{_mlp_forward.1} parent=1 // pred_check_branch
      %508 = sbr.rel (%p506) target = $region49
    $region48: #{_mlp_forward.1} parent=1 // pred_region
      %v509 = vld [vmem:[#allocation3] sm:$0xff]
      %v510 = vld [vmem:[#allocation3 + $0x8] sm:$0xff]
      %v511 = vld [vmem:[%s6] sm:$0x1]
      %v513 = vlaneseq
      %v514 = vshrl.u32 %v513, 7
      %v515 = vsub.s32 0, %v514
      %v516 = vrot.slane %v511, %v515
      %v518 = vadd.f32 %v509, %v516
      %v519 = vadd.f32 %v510, %v516
      %520 = vst [vmem:[#allocation10] sm:$0xff] %v518
      %521 = vst [vmem:[#allocation10 + $0x8] sm:$0xff] %v519
    $region49: #{_mlp_forward.1} parent=1 // pred_fallthru
      _
    // Predicated region
    $region50: #{_mlp_forward.1} parent=1 // pred_check
      _
    $region51: #{_mlp_forward.1} parent=1 // pred_check_branch
      %523 = sbr.rel (0) target = $region53
    $region52: #{_mlp_forward.1} parent=1 // pred_region
      %s525 = ssub.s32 256, 256
      %526 = vsyncadd [#allocation6], %s525
      %s527 = sshll.u32 [#allocation10], 4
      %s528 = int_to_ptr.vmem [resolvable:$true] %s527
      %533 = dma.vmem_to_hbm [thread:$0]  %s528, 256, %s7, [#allocation6], 128, 128, 8
    $region53: #{_mlp_forward.1} parent=1 // pred_fallthru
      _
    // Predicated region
    $region54: #{_mlp_forward.1} parent=1 // pred_check
      _
    $region55: #{_mlp_forward.1} parent=1 // pred_check_branch
      %535 = sbr.rel (0) target = $region57
    $region56: #{_mlp_forward.1} parent=1 // pred_region
      %536 = dma.done [#allocation6], 256
    $region57: #{_mlp_forward.1} parent=1 // pred_fallthru
      _
    %537 = vsyncpa [#allocation5], 1
    %538 = vsyncpa [#allocation8], 1
    %539 = vsyncpa [#allocation6], 1

</llo_original>
